<compile_context>
chip_gen: v6e
topology: v6e:2x2x1
jax: 0.10.0
libtpu: 0.0.40
codegen_flags: <defaults>
</compile_context>

<pallas_src>
import jax
import jax.numpy as jnp
from jax.experimental import pallas as pl
from jax.experimental.pallas import tpu as pltpu


def _dma_passthrough_kernel(src_ref, dst_ref, sem):
    # src_ref / dst_ref are raw HBM refs (memory_space=pl.ANY).
    # One HBM->HBM DMA copies the whole prompt tensor; no VMEM staging,
    # no vector loads/stores.
    cp = pltpu.make_async_copy(src_ref, dst_ref, sem)
    cp.start()
    cp.wait()


def _lane_dense_view(ctx):
    """Metadata-only reshape of the contiguous ctx tensor to a lane-dense,
    sublane-aligned 2-D slab when the element count allows."""
    layers, n_ctx, ctx_dim = ctx.shape
    total = layers * n_ctx * ctx_dim
    # Minimum sublane tile: 8 rows for 32-bit dtypes, 16 for 16-bit packed.
    sub_min = 8 if ctx.dtype.itemsize == 4 else 16
    for last in (1024, 512, 256, 128):
        if total % last == 0 and (total // last) % sub_min == 0:
            return ctx.reshape(total // last, last)
    if total % 128 == 0:
        return ctx.reshape(total // 128, 128)
    # Fallback: full-extent 2-D view (always legal; perf-only downside).
    return ctx.reshape(layers * n_ctx, ctx_dim)


def vpt_deep_prompt_forward(ctx):
    """Forward of VPTDeepPromptLearner: returns the (layers, n_ctx, ctx_dim) ctx.

    Implemented as a single HBM->HBM DMA in Pallas (no VMEM staging, no grid).
    """
    layers, n_ctx, ctx_dim = ctx.shape
    total = layers * n_ctx * ctx_dim

    flat = _lane_dense_view(ctx)
    bytes_accessed = 2 * total * ctx.dtype.itemsize  # one read + one write

    out_flat = pl.pallas_call(
        _dma_passthrough_kernel,
        out_shape=jax.ShapeDtypeStruct(flat.shape, flat.dtype),
        in_specs=[pl.BlockSpec(memory_space=pl.ANY)],
        out_specs=pl.BlockSpec(memory_space=pl.ANY),
        scratch_shapes=[pltpu.SemaphoreType.DMA],
        cost_estimate=pl.CostEstimate(
            flops=0, transcendentals=0, bytes_accessed=bytes_accessed),
    )(flat)

    return out_flat.reshape(layers, n_ctx, ctx_dim)


def init_ctx_vectors(key, layers, n_ctx, ctx_dim, dtype=jnp.float32):
    """Deterministic per-layer normal(std=0.02) init, mirroring the PyTorch loop."""
    keys = jax.random.split(key, layers)
    per_layer = [
        (0.02 * jax.random.normal(k, (n_ctx, ctx_dim), dtype=jnp.float32)).astype(dtype)
        for k in keys
    ]
    return jnp.stack(per_layer, axis=0)


if __name__ == "__main__":
    # Small config consistent with the module:
    #   layers  = clip_model.visual.transformer.layers
    #   n_ctx   = cfg.TRAINER.VPT.N_CTX
    #   ctx_dim = clip_model.visual.conv1.out_channels
    LAYERS, N_CTX, CTX_DIM = 4, 8, 32
    key = jax.random.PRNGKey(0)

    ctx = init_ctx_vectors(key, LAYERS, N_CTX, CTX_DIM, dtype=jnp.float32)

    out = vpt_deep_prompt_forward(ctx)
    out = jax.block_until_ready(out)

    assert out.shape == (LAYERS, N_CTX, CTX_DIM)
    assert out.dtype == ctx.dtype
    assert bool(jnp.allclose(out, ctx)), "Pallas forward does not match ctx parameter"

    print("KERNEL_OK")
</pallas_src>

<mosaic_0001>
module attributes {stable_mosaic.version = 11 : i64} {
  func.func @_dma_passthrough_kernel(%arg0: memref<8x128xf32, #tpu.memory_space<any>>, %arg1: memref<8x128xf32, #tpu.memory_space<any>>, %arg2: memref<!tpu.dma_semaphore, #tpu.memory_space<semaphore_mem>>) attributes {dimension_semantics = [], scalar_prefetch = 0 : i64, scratch_operands = 1 : i64, tpu.core_type = #tpu.core_type<tc>} {
    tpu.enqueue_dma source(%arg0 : memref<8x128xf32, #tpu.memory_space<any>>) target(%arg1 : memref<8x128xf32, #tpu.memory_space<any>>) target_semaphore(%arg2 : memref<!tpu.dma_semaphore, #tpu.memory_space<semaphore_mem>>)
    tpu.wait_dma2 semaphore(%arg2 : memref<!tpu.dma_semaphore, #tpu.memory_space<semaphore_mem>>) src(%arg0 : memref<8x128xf32, #tpu.memory_space<any>>) dst(%arg1 : memref<8x128xf32, #tpu.memory_space<any>>)
    return
  }
}

</mosaic_0001>

<llo_original>
// kernel: tpu_custom_call.1
$region0: #{tpu_custom_call.1}
  #allocation0 [shape = 'u32[]', space=smem, size = 0x4, offset = 0x4, fixed_abs, tag = 'smem constant byte address 0x4 - core index']
  #allocation1 [shape = 'u32[144,128]{1,0:T(1,128)}', space=vmem, size = 0x12000, scoped, tag = 'internal scratch']
  #allocation2 [shape = 's32[1]{0}', space=sflag, size = 0x4, scoped, tag = 'scratch operand']
  #allocation3 [shape = 's32[]', space=sflag, size = 0x4, offset = 0, fixed_abs, tag = 'sflag constant byte address 0x0 - dummy sync flag']
  #allocation4 [shape = 'u32[0]{0}', space=smem, size = 0, offset = 0, fixed_abs, tag = 'smem constant byte address 0x0 - null']
  %s0 = inlined_call_operand.hbm [shape: f32[8,128], index: 0, kind: input, shape index: {}]
  %s1 = inlined_call_operand.hbm [shape: f32[8,128], index: 1, kind: output, shape index: {}]
  %s2 = sld [smem:[#allocation0]]
  $region2: #{tpu_custom_call.1} parent=0
    _
  %s4 = ssub.s32 1, %s2
  %s5 = scalar_select 0, %s4, %s2
  %s7 = sshll.u32 1, 14
  %s8 = sxor.u32 4294967295, %s7
  %12 = dma.general %s0, 128, %s1, [#allocation2], 131072, [#allocation4], 0, 0
  %s13 = smul.u32 8, 1
  %s14 = sshll.u32 %s13, 4
  %15 = dma.done [#allocation2], %s14
  %16 = vsyncmov [#allocation2]
  %s17 = vpop.sfrf %16
  %p18 = scmp.eq.s32.totalorder %s17, 0
  %p19 = pneg %p18
  %21 = shalt.err (%p19)

</llo_original>
